<compile_context>
chip_gen: v6e
topology: v6e:2x2x1
jax: 0.10.0
libtpu: 0.0.40
codegen_flags: <defaults>
</compile_context>

<pallas_src>
import functools

import jax
import jax.numpy as jnp
from jax.experimental import pallas as pl
from jax.experimental.pallas import tpu as pltpu

BN_EPS = 1e-5


def _stats_kernel(x_ref, w1_ref, b1_ref, stats_ref, *, tm, batch):
    """Pass 1: accumulate per-feature sum / sum-of-squares of relu(x@w1+b1)."""
    i = pl.program_id(0)

    @pl.when(i == 0)
    def _init():
        stats_ref[...] = jnp.zeros_like(stats_ref)

    x = x_ref[...].astype(jnp.bfloat16)
    h = jnp.dot(x, w1_ref[...], preferred_element_type=jnp.float32) + b1_ref[...]
    h = jnp.maximum(h, 0.0)

    if batch % tm != 0:
        # Mask rows of the (padded) last tile that fall past the true batch.
        rows = i * tm + jax.lax.broadcasted_iota(jnp.int32, (tm, 1), 0)
        h = jnp.where(rows < batch, h, 0.0)

    partial = jnp.concatenate(
        [jnp.sum(h, axis=0, keepdims=True), jnp.sum(h * h, axis=0, keepdims=True)],
        axis=0,
    )
    stats_ref[...] += partial


def _output_kernel(x_ref, w1_ref, b1_ref, w2_ref, b2_ref, o_ref):
    """Pass 2: recompute linear1+ReLU, apply BN folded into (w2_eff, b2_eff)."""
    x = x_ref[...].astype(jnp.bfloat16)
    h = jnp.dot(x, w1_ref[...], preferred_element_type=jnp.float32) + b1_ref[...]
    h = jnp.maximum(h, 0.0).astype(jnp.bfloat16)
    o_ref[...] = (
        jnp.dot(h, w2_ref[...], preferred_element_type=jnp.float32) + b2_ref[...]
    )


@jax.jit
def ctrnet_forward(x, w1_bf, b1, gamma, beta, w2, b2):
    B, in_dim = x.shape
    hidden = w1_bf.shape[1]
    out_dim = w2.shape[1]

    # Batch tile: multiple of 8 (sublane), capped at 512 (fills the 256x256 MXU
    # M dimension on v6e/v7x; a few MiB of VMEM per tile on all generations).
    tm = min(512, ((B + 7) // 8) * 8)
    nt = pl.cdiv(B, tm)

    def resident(shape):
        return pl.BlockSpec(shape, lambda i: (0, 0))

    # ---- pass 1: global per-feature sum / sum-of-squares ----
    stats = pl.pallas_call(
        functools.partial(_stats_kernel, tm=tm, batch=B),
        out_shape=jax.ShapeDtypeStruct((2, hidden), jnp.float32),
        grid_spec=pltpu.PrefetchScalarGridSpec(
            num_scalar_prefetch=0,
            grid=(nt,),
            in_specs=[
                pl.BlockSpec((tm, in_dim), lambda i: (i, 0)),
                resident((in_dim, hidden)),
                resident((1, hidden)),
            ],
            out_specs=pl.BlockSpec((2, hidden), lambda i: (0, 0)),
        ),
        compiler_params=pltpu.CompilerParams(dimension_semantics=("arbitrary",)),
    )(x, w1_bf, b1)

    # ---- fold BN (batch statistics) into the second linear (tiny XLA step) ----
    inv_b = 1.0 / B
    mean = stats[0:1] * inv_b                               # (1, hidden)
    var = stats[1:2] * inv_b - mean * mean                  # biased, like BN training
    scale = gamma * jax.lax.rsqrt(var + BN_EPS)             # (1, hidden)
    shift = beta - mean * scale                             # (1, hidden)
    w2_eff = (w2 * scale.reshape(hidden, 1)).astype(jnp.bfloat16)  # (hidden, out)
    b2_eff = shift @ w2 + b2                                 # (1, out)

    # ---- pass 2: recompute linear1+ReLU per tile, folded BN + linear2 ----
    out = pl.pallas_call(
        _output_kernel,
        out_shape=jax.ShapeDtypeStruct((B, out_dim), jnp.float32),
        grid_spec=pltpu.PrefetchScalarGridSpec(
            num_scalar_prefetch=0,
            grid=(nt,),
            in_specs=[
                pl.BlockSpec((tm, in_dim), lambda i: (i, 0)),
                resident((in_dim, hidden)),
                resident((1, hidden)),
                resident((hidden, out_dim)),
                resident((1, out_dim)),
            ],
            out_specs=pl.BlockSpec((tm, out_dim), lambda i: (i, 0)),
        ),
        compiler_params=pltpu.CompilerParams(dimension_semantics=("parallel",)),
    )(x, w1_bf, b1, w2_eff, b2_eff)

    return out


def ctrnet_reference(x, w1, b1, gamma, beta, w2, b2):
    h = jnp.maximum(x @ w1 + b1, 0.0)
    mean = jnp.mean(h, axis=0, keepdims=True)
    var = jnp.mean((h - mean) ** 2, axis=0, keepdims=True)  # biased, like BN training
    h = (h - mean) / jnp.sqrt(var + BN_EPS) * gamma + beta
    return h @ w2 + b2


if __name__ == "__main__":
    B, IN_DIM, HIDDEN, OUT_DIM = 8, 32, 1024, 16

    key = jax.random.PRNGKey(0)
    kx, kw1, kb1, kw2, kb2 = jax.random.split(key, 5)

    x = jax.random.normal(kx, (B, IN_DIM), dtype=jnp.float32)

    # Deterministic parameter init (PyTorch-like uniform scaling).
    lim1 = 1.0 / (IN_DIM ** 0.5)
    w1 = jax.random.uniform(kw1, (IN_DIM, HIDDEN), jnp.float32, -lim1, lim1)
    b1 = jax.random.uniform(kb1, (1, HIDDEN), jnp.float32, -lim1, lim1)

    gamma = jnp.ones((1, HIDDEN), jnp.float32)   # BatchNorm1d weight
    beta = jnp.zeros((1, HIDDEN), jnp.float32)   # BatchNorm1d bias

    lim2 = 1.0 / (HIDDEN ** 0.5)
    w2 = jax.random.uniform(kw2, (HIDDEN, OUT_DIM), jnp.float32, -lim2, lim2)
    b2 = jax.random.uniform(kb2, (1, OUT_DIM), jnp.float32, -lim2, lim2)

    # One-time (init-time) weight preparation, hoisted out of the forward call.
    w1_bf = w1.astype(jnp.bfloat16)

    out = ctrnet_forward(x, w1_bf, b1, gamma, beta, w2, b2)
    out = jax.block_until_ready(out)

    ref = ctrnet_reference(x, w1, b1, gamma, beta, w2, b2)
    assert out.shape == (B, OUT_DIM)
    # bf16 matmul inputs (f32 accumulation) -> loosened tolerance vs f32 reference.
    assert jnp.allclose(out, ref, atol=5e-2, rtol=5e-2), "mismatch vs reference"

    print("KERNEL_OK")
</pallas_src>

<mosaic_0001>
module attributes {stable_mosaic.version = 11 : i64} {
  func.func @_stats_kernel(%arg0: i32, %arg1: memref<8x32xf32, #tpu.memory_space<vmem>>, %arg2: memref<32x1024xbf16, #tpu.memory_space<vmem>>, %arg3: memref<1x1024xf32, #tpu.memory_space<vmem>>, %arg4: memref<2x1024xf32, #tpu.memory_space<vmem>>) attributes {dimension_semantics = [#tpu.dimension_semantics<arbitrary>], iteration_bounds = array<i64: 1>, scalar_prefetch = 0 : i64, scratch_operands = 0 : i64, tpu.core_type = #tpu.core_type<tc>, window_params = [{transform_indices = @transform_0, window_bounds = array<i64: 8, 32>}, {pipeline_mode = #tpu.pipeline_mode<synchronous>, transform_indices = @transform_1, window_bounds = array<i64: 32, 1024>}, {pipeline_mode = #tpu.pipeline_mode<synchronous>, transform_indices = @transform_2, window_bounds = array<i64: 1, 1024>}, {pipeline_mode = #tpu.pipeline_mode<synchronous>, transform_indices = @transform_3, window_bounds = array<i64: 2, 1024>}]} {
    %c0_i32 = arith.constant 0 : i32
    %0 = arith.cmpi eq, %arg0, %c0_i32 : i32
    %1 = arith.extui %0 : i1 to i32
    %c0_i32_0 = arith.constant 0 : i32
    %2 = arith.cmpi ne, %1, %c0_i32_0 : i32
    scf.if %2 {
      %cst_13 = arith.constant 0.000000e+00 : f32
      %21 = vector.broadcast %cst_13 : f32 to vector<2x1024xf32>
      %c0_14 = arith.constant 0 : index
      %c0_15 = arith.constant 0 : index
      %22 = vector.load %arg4[%c0_14, %c0_15] : memref<2x1024xf32, #tpu.memory_space<vmem>>, vector<2x1024xf32>
      tpu.vector_store %arg4[%c0_14, %c0_15], %21 {strides = array<i32>} : memref<2x1024xf32, #tpu.memory_space<vmem>>, vector<2x1024xf32>,
    } else {
    }
    %c0 = arith.constant 0 : index
    %c0_1 = arith.constant 0 : index
    %3 = vector.load %arg1[%c0, %c0_1] : memref<8x32xf32, #tpu.memory_space<vmem>>, vector<8x32xf32>
    %4 = arith.truncf %3 : vector<8x32xf32> to vector<8x32xbf16>
    %c0_2 = arith.constant 0 : index
    %c0_3 = arith.constant 0 : index
    %5 = vector.load %arg2[%c0_2, %c0_3] : memref<32x1024xbf16, #tpu.memory_space<vmem>>, vector<32x1024xbf16>
    %cst = arith.constant dense<0.000000e+00> : vector<8x1024xf32>
    %6 = tpu.matmul %4, %5, %cst {dimension_numbers = #tpu.dot_dimension_numbers<[1], [0], [0], [1], [0, 0, 1, 1], [], []>} : vector<8x32xbf16>, vector<32x1024xbf16>, vector<8x1024xf32> -> vector<8x1024xf32>
    %c0_4 = arith.constant 0 : index
    %c0_5 = arith.constant 0 : index
    %7 = vector.load %arg3[%c0_4, %c0_5] : memref<1x1024xf32, #tpu.memory_space<vmem>>, vector<1x1024xf32>
    %8 = vector.broadcast %7 : vector<1x1024xf32> to vector<8x1024xf32>
    %9 = arith.addf %6, %8 : vector<8x1024xf32>
    %cst_6 = arith.constant 0.000000e+00 : f32
    %10 = vector.broadcast %cst_6 : f32 to vector<8x1024xf32>
    %11 = arith.maximumf %9, %10 : vector<8x1024xf32>
    %cst_7 = arith.constant dense<0.000000e+00> : vector<1024xf32>
    %12 = vector.multi_reduction <add>, %11, %cst_7 [0] : vector<8x1024xf32> to vector<1024xf32>
    %13 = vector.shape_cast %12 : vector<1024xf32> to vector<1x1024xf32>
    %14 = arith.mulf %11, %11 : vector<8x1024xf32>
    %cst_8 = arith.constant dense<0.000000e+00> : vector<1024xf32>
    %15 = vector.multi_reduction <add>, %14, %cst_8 [0] : vector<8x1024xf32> to vector<1024xf32>
    %16 = vector.shape_cast %15 : vector<1024xf32> to vector<1x1024xf32>
    %17 = tpu.concatenate %13, %16 in 0 : vector<1x1024xf32>, vector<1x1024xf32> -> vector<2x1024xf32>
    %c0_9 = arith.constant 0 : index
    %c0_10 = arith.constant 0 : index
    %18 = vector.load %arg4[%c0_9, %c0_10] : memref<2x1024xf32, #tpu.memory_space<vmem>>, vector<2x1024xf32>
    %19 = arith.addf %18, %17 : vector<2x1024xf32>
    %c0_11 = arith.constant 0 : index
    %c0_12 = arith.constant 0 : index
    %20 = vector.load %arg4[%c0_11, %c0_12] : memref<2x1024xf32, #tpu.memory_space<vmem>>, vector<2x1024xf32>
    tpu.vector_store %arg4[%c0_11, %c0_12], %19 {strides = array<i32>} : memref<2x1024xf32, #tpu.memory_space<vmem>>, vector<2x1024xf32>,
    return
  }
  func.func @transform_0(%arg0: i32) -> (i32, i32) {
    %c0_i32 = arith.constant 0 : i32
    %c0_i32_0 = arith.constant 0 : i32
    return %arg0, %c0_i32 : i32, i32
  }
  func.func @transform_1(%arg0: i32) -> (i32, i32) {
    %c0_i32 = arith.constant 0 : i32
    %c0_i32_0 = arith.constant 0 : i32
    %c0_i32_1 = arith.constant 0 : i32
    return %c0_i32, %c0_i32_0 : i32, i32
  }
  func.func @transform_2(%arg0: i32) -> (i32, i32) {
    %c0_i32 = arith.constant 0 : i32
    %c0_i32_0 = arith.constant 0 : i32
    %c0_i32_1 = arith.constant 0 : i32
    return %c0_i32, %c0_i32_0 : i32, i32
  }
  func.func @transform_3(%arg0: i32) -> (i32, i32) {
    %c0_i32 = arith.constant 0 : i32
    %c0_i32_0 = arith.constant 0 : i32
    %c0_i32_1 = arith.constant 0 : i32
    return %c0_i32, %c0_i32_0 : i32, i32
  }
}

module attributes {stable_mosaic.version = 11 : i64} {
  func.func @_output_kernel(%arg0: i32, %arg1: memref<8x32xf32, #tpu.memory_space<vmem>>, %arg2: memref<32x1024xbf16, #tpu.memory_space<vmem>>, %arg3: memref<1x1024xf32, #tpu.memory_space<vmem>>, %arg4: memref<1024x16xbf16, #tpu.memory_space<vmem>>, %arg5: memref<1x16xf32, #tpu.memory_space<vmem>>, %arg6: memref<8x16xf32, #tpu.memory_space<vmem>>) attributes {dimension_semantics = [#tpu.dimension_semantics<parallel>], iteration_bounds = array<i64: 1>, scalar_prefetch = 0 : i64, scratch_operands = 0 : i64, tpu.core_type = #tpu.core_type<tc>, window_params = [{transform_indices = @transform_0, window_bounds = array<i64: 8, 32>}, {pipeline_mode = #tpu.pipeline_mode<synchronous>, transform_indices = @transform_1, window_bounds = array<i64: 32, 1024>}, {pipeline_mode = #tpu.pipeline_mode<synchronous>, transform_indices = @transform_2, window_bounds = array<i64: 1, 1024>}, {pipeline_mode = #tpu.pipeline_mode<synchronous>, transform_indices = @transform_3, window_bounds = array<i64: 1024, 16>}, {pipeline_mode = #tpu.pipeline_mode<synchronous>, transform_indices = @transform_4, window_bounds = array<i64: 1, 16>}, {transform_indices = @transform_5, window_bounds = array<i64: 8, 16>}]} {
    %c0 = arith.constant 0 : index
    %c0_0 = arith.constant 0 : index
    %0 = vector.load %arg1[%c0, %c0_0] : memref<8x32xf32, #tpu.memory_space<vmem>>, vector<8x32xf32>
    %1 = arith.truncf %0 : vector<8x32xf32> to vector<8x32xbf16>
    %c0_1 = arith.constant 0 : index
    %c0_2 = arith.constant 0 : index
    %2 = vector.load %arg2[%c0_1, %c0_2] : memref<32x1024xbf16, #tpu.memory_space<vmem>>, vector<32x1024xbf16>
    %cst = arith.constant dense<0.000000e+00> : vector<8x1024xf32>
    %3 = tpu.matmul %1, %2, %cst {dimension_numbers = #tpu.dot_dimension_numbers<[1], [0], [0], [1], [0, 0, 1, 1], [], []>} : vector<8x32xbf16>, vector<32x1024xbf16>, vector<8x1024xf32> -> vector<8x1024xf32>
    %c0_3 = arith.constant 0 : index
    %c0_4 = arith.constant 0 : index
    %4 = vector.load %arg3[%c0_3, %c0_4] : memref<1x1024xf32, #tpu.memory_space<vmem>>, vector<1x1024xf32>
    %5 = vector.broadcast %4 : vector<1x1024xf32> to vector<8x1024xf32>
    %6 = arith.addf %3, %5 : vector<8x1024xf32>
    %cst_5 = arith.constant 0.000000e+00 : f32
    %7 = vector.broadcast %cst_5 : f32 to vector<8x1024xf32>
    %8 = arith.maximumf %6, %7 : vector<8x1024xf32>
    %9 = arith.truncf %8 : vector<8x1024xf32> to vector<8x1024xbf16>
    %c0_6 = arith.constant 0 : index
    %c0_7 = arith.constant 0 : index
    %10 = vector.load %arg4[%c0_6, %c0_7] : memref<1024x16xbf16, #tpu.memory_space<vmem>>, vector<1024x16xbf16>
    %cst_8 = arith.constant dense<0.000000e+00> : vector<8x16xf32>
    %11 = tpu.matmul %9, %10, %cst_8 {dimension_numbers = #tpu.dot_dimension_numbers<[1], [0], [0], [1], [0, 0, 1, 1], [], []>} : vector<8x1024xbf16>, vector<1024x16xbf16>, vector<8x16xf32> -> vector<8x16xf32>
    %c0_9 = arith.constant 0 : index
    %c0_10 = arith.constant 0 : index
    %12 = vector.load %arg5[%c0_9, %c0_10] : memref<1x16xf32, #tpu.memory_space<vmem>>, vector<1x16xf32>
    %13 = vector.broadcast %12 : vector<1x16xf32> to vector<8x16xf32>
    %14 = arith.addf %11, %13 : vector<8x16xf32>
    %c0_11 = arith.constant 0 : index
    %c0_12 = arith.constant 0 : index
    %15 = vector.load %arg6[%c0_11, %c0_12] : memref<8x16xf32, #tpu.memory_space<vmem>>, vector<8x16xf32>
    tpu.vector_store %arg6[%c0_11, %c0_12], %14 {strides = array<i32>} : memref<8x16xf32, #tpu.memory_space<vmem>>, vector<8x16xf32>,
    return
  }
  func.func @transform_0(%arg0: i32) -> (i32, i32) {
    %c0_i32 = arith.constant 0 : i32
    %c0_i32_0 = arith.constant 0 : i32
    return %arg0, %c0_i32 : i32, i32
  }
  func.func @transform_1(%arg0: i32) -> (i32, i32) {
    %c0_i32 = arith.constant 0 : i32
    %c0_i32_0 = arith.constant 0 : i32
    %c0_i32_1 = arith.constant 0 : i32
    return %c0_i32, %c0_i32_0 : i32, i32
  }
  func.func @transform_2(%arg0: i32) -> (i32, i32) {
    %c0_i32 = arith.constant 0 : i32
    %c0_i32_0 = arith.constant 0 : i32
    %c0_i32_1 = arith.constant 0 : i32
    return %c0_i32, %c0_i32_0 : i32, i32
  }
  func.func @transform_3(%arg0: i32) -> (i32, i32) {
    %c0_i32 = arith.constant 0 : i32
    %c0_i32_0 = arith.constant 0 : i32
    %c0_i32_1 = arith.constant 0 : i32
    return %c0_i32, %c0_i32_0 : i32, i32
  }
  func.func @transform_4(%arg0: i32) -> (i32, i32) {
    %c0_i32 = arith.constant 0 : i32
    %c0_i32_0 = arith.constant 0 : i32
    %c0_i32_1 = arith.constant 0 : i32
    return %c0_i32, %c0_i32_0 : i32, i32
  }
  func.func @transform_5(%arg0: i32) -> (i32, i32) {
    %c0_i32 = arith.constant 0 : i32
    %c0_i32_0 = arith.constant 0 : i32
    return %arg0, %c0_i32 : i32, i32
  }
}

</mosaic_0001>

<llo_original>
// kernel: ctrnet_forward.2
$region0: #{ctrnet_forward.2}
  #allocation0 [shape = 'u32[]', space=smem, size = 0x4, offset = 0x4, fixed_abs, tag = 'smem constant byte address 0x4 - core index']
  #allocation1 [shape = 'u32[144,128]{1,0:T(1,128)}', space=vmem, size = 0x12000, scoped, tag = 'internal scratch']
  %s0 = inlined_call_operand.hbm [shape: f32[8,32], index: 0, kind: input, shape index: {}]
  %s1 = inlined_call_operand.hbm [shape: bf16[32,1024], index: 1, kind: input, shape index: {}]
  %s2 = inlined_call_operand.vmem [shape: f32[1,1024], index: 2, kind: input, shape index: {}]
  %s3 = inlined_call_operand.vmem [shape: f32[2,1024], index: 3, kind: output, shape index: {}]
  %s4 = sld [smem:[#allocation0]]
  $region34: #{ctrnet_forward.2} parent=0
    _
  %s6 = ssub.s32 1, %s4
  %s7 = scalar_select 0, %s6, %s4
  $region1: #{ctrnet_forward.2} parent=0
    #allocation2 [shape = 'u8[4096]{0}', space=vmem, size = 0x1000, scoped, tag = 'input window, operand 0, single buffered']
    #allocation3 [shape = 's32[1]{0}', space=sflag, size = 0x4, scoped, tag = 'scoped memory for ctrnet_forward.2']
    #allocation4 [shape = 'u8[65536]{0}', space=vmem, size = 0x10000, scoped, tag = 'input window, operand 1, single buffered']
    #allocation5 [shape = 's32[1]{0}', space=sflag, size = 0x4, scoped, tag = 'scoped memory for ctrnet_forward.2']
    %8 = vsyncpa [#allocation3], 0
    %9 = vsyncpa [#allocation5], 0
    // Predicated region
    $region2: #{ctrnet_forward.2} parent=1 // pred_check
      _
    $region3: #{ctrnet_forward.2} parent=1 // pred_check_branch
      %11 = sbr.rel (0) target = $region5
    $region4: #{ctrnet_forward.2} parent=1 // pred_region
      %s13 = ssub.s32 128, 128
      %14 = vsyncadd [#allocation3], %s13
      %s16 = sshll.u32 [#allocation2], 4
      %s17 = int_to_ptr.vmem [resolvable:$true] %s16
      %19 = dma.hbm_to_vmem [thread:$0]  %s0, 128, %s17, [#allocation3]
    $region5: #{ctrnet_forward.2} parent=1 // pred_fallthru
      _
    // Predicated region
    $region6: #{ctrnet_forward.2} parent=1 // pred_check
      _
    $region7: #{ctrnet_forward.2} parent=1 // pred_check_branch
      %21 = sbr.rel (0) target = $region9
    $region8: #{ctrnet_forward.2} parent=1 // pred_region
      %s23 = ssub.s32 2048, 2048
      %24 = vsyncadd [#allocation5], %s23
      %s25 = sshll.u32 [#allocation4], 4
      %s26 = int_to_ptr.vmem [resolvable:$true] %s25
      %31 = dma.hbm_to_vmem [thread:$0]  %s1, 2048, %s26, [#allocation5], 512, 512, 32
    $region9: #{ctrnet_forward.2} parent=1 // pred_fallthru
      _
    // Predicated region
    $region10: #{ctrnet_forward.2} parent=1 // pred_check
      _
    $region11: #{ctrnet_forward.2} parent=1 // pred_check_branch
      %33 = sbr.rel (0) target = $region13
    $region12: #{ctrnet_forward.2} parent=1 // pred_region
      _
    $region13: #{ctrnet_forward.2} parent=1 // pred_fallthru
      _
    // Predicated region
    $region14: #{ctrnet_forward.2} parent=1 // pred_check
      _
    $region15: #{ctrnet_forward.2} parent=1 // pred_check_branch
      %35 = sbr.rel (0) target = $region17
    $region16: #{ctrnet_forward.2} parent=1 // pred_region
      %36 = dma.done [#allocation3], 128
    $region17: #{ctrnet_forward.2} parent=1 // pred_fallthru
      _
    // Predicated region
    $region18: #{ctrnet_forward.2} parent=1 // pred_check
      _
    $region19: #{ctrnet_forward.2} parent=1 // pred_check_branch
      %38 = sbr.rel (0) target = $region21
    $region20: #{ctrnet_forward.2} parent=1 // pred_region
      %39 = dma.done [#allocation5], 2048
    $region21: #{ctrnet_forward.2} parent=1 // pred_fallthru
      _
    %p41 = scmp.eq.s32.totalorder 0, 0
    // Predicated region
    $region22: #{ctrnet_forward.2} parent=1 // pred_check
      %p42 = pneg %p41
    $region23: #{ctrnet_forward.2} parent=1 // pred_check_branch
      %44 = sbr.rel (%p42) target = $region25
    $region24: #{ctrnet_forward.2} parent=1 // pred_region
      %45 = vst [vmem:[%s3] sm:$0xff] 0.0
      %46 = vst [vmem:[%s3 + $0x8] sm:$0xff] 0.0
    $region25: #{ctrnet_forward.2} parent=1 // pred_fallthru
      _
    %v47 = vld [vmem:[#allocation2] sm:$0xff]
    %v48 = vpack.c.bf16 %v47, %v47
    %v49 = vld [vmem:[#allocation4] sm:$0xff]
    %v50 = vld [vmem:[#allocation4 + $0x8] sm:$0xff]
    %v51 = vld [vmem:[#allocation4 + $0x10] sm:$0xff]
    %v52 = vld [vmem:[#allocation4 + $0x18] sm:$0xff]
    %v53 = vld [vmem:[#allocation4 + $0x20] sm:$0xff]
    %v54 = vld [vmem:[#allocation4 + $0x28] sm:$0xff]
    %v55 = vld [vmem:[#allocation4 + $0x30] sm:$0xff]
    %v56 = vld [vmem:[#allocation4 + $0x38] sm:$0xff]
    %v57 = vld [vmem:[#allocation4 + $0x40] sm:$0xff]
    %v58 = vld [vmem:[#allocation4 + $0x48] sm:$0xff]
    %v59 = vld [vmem:[#allocation4 + $0x50] sm:$0xff]
    %v60 = vld [vmem:[#allocation4 + $0x58] sm:$0xff]
    %v61 = vld [vmem:[#allocation4 + $0x60] sm:$0xff]
    %v62 = vld [vmem:[#allocation4 + $0x68] sm:$0xff]
    %v63 = vld [vmem:[#allocation4 + $0x70] sm:$0xff]
    %v64 = vld [vmem:[#allocation4 + $0x78] sm:$0xff]
    %v65 = vld [vmem:[%s2] sm:$0xff]
    %v67 = vlaneseq
    %v68 = vshrl.u32 %v67, 7
    %v69 = vsub.s32 0, %v68
    %v70 = vrot.slane %v65, %v69
    %v71 = vlaneseq
    %v72 = vshrl.u32 %v71, 7
    %v73 = vsub.s32 1, %v72
    %v74 = vrot.slane %v65, %v73
    %v75 = vlaneseq
    %v76 = vshrl.u32 %v75, 7
    %v77 = vsub.s32 2, %v76
    %v78 = vrot.slane %v65, %v77
    %v79 = vlaneseq
    %v80 = vshrl.u32 %v79, 7
    %v81 = vsub.s32 3, %v80
    %v82 = vrot.slane %v65, %v81
    %v83 = vlaneseq
    %v84 = vshrl.u32 %v83, 7
    %v85 = vsub.s32 4, %v84
    %v86 = vrot.slane %v65, %v85
    %v87 = vlaneseq
    %v88 = vshrl.u32 %v87, 7
    %v89 = vsub.s32 5, %v88
    %v90 = vrot.slane %v65, %v89
    %v91 = vlaneseq
    %v92 = vshrl.u32 %v91, 7
    %v93 = vsub.s32 6, %v92
    %v94 = vrot.slane %v65, %v93
    %v95 = vlaneseq
    %v96 = vshrl.u32 %v95, 7
    %v97 = vsub.s32 7, %v96
    %v98 = vrot.slane %v65, %v97
    %v123 = vunpack.c.l.b16 %v49
    %v124 = vunpack.c.h.b16 %v49
    %v125 = vunpack.c.l.b16 %v50
    %v126 = vunpack.c.h.b16 %v50
    %v127 = vunpack.c.l.b16 %v51
    %v128 = vunpack.c.h.b16 %v51
    %v129 = vunpack.c.l.b16 %v52
    %v130 = vunpack.c.h.b16 %v52
    %v131 = vunpack.c.l.b16 %v53
    %v132 = vunpack.c.h.b16 %v53
    %v133 = vunpack.c.l.b16 %v54
    %v134 = vunpack.c.h.b16 %v54
    %v135 = vunpack.c.l.b16 %v55
    %v136 = vunpack.c.h.b16 %v55
    %v137 = vunpack.c.l.b16 %v56
    %v138 = vunpack.c.h.b16 %v56
    %v139 = vunpack.c.l.b16 %v57
    %v140 = vunpack.c.h.b16 %v57
    %v141 = vunpack.c.l.b16 %v58
    %v142 = vunpack.c.h.b16 %v58
    %v143 = vunpack.c.l.b16 %v59
    %v144 = vunpack.c.h.b16 %v59
    %v145 = vunpack.c.l.b16 %v60
    %v146 = vunpack.c.h.b16 %v60
    %v147 = vunpack.c.l.b16 %v61
    %v148 = vunpack.c.h.b16 %v61
    %v149 = vunpack.c.l.b16 %v62
    %v150 = vunpack.c.h.b16 %v62
    %v151 = vunpack.c.l.b16 %v63
    %v152 = vunpack.c.h.b16 %v63
    %v153 = vunpack.c.l.b16 %v64
    %v154 = vunpack.c.h.b16 %v64
    %v155 = vpack.c.b16 %v131, %v123
    %v156 = vpack.c.b16 %v132, %v124
    %v157 = vpack.c.b16 %v133, %v125
    %v158 = vpack.c.b16 %v134, %v126
    %v159 = vpack.c.b16 %v135, %v127
    %v160 = vpack.c.b16 %v136, %v128
    %v161 = vpack.c.b16 %v137, %v129
    %v162 = vpack.c.b16 %v138, %v130
    %v163 = vpack.c.b16 %v147, %v139
    %v164 = vpack.c.b16 %v148, %v140
    %v165 = vpack.c.b16 %v149, %v141
    %v166 = vpack.c.b16 %v150, %v142
    %v167 = vpack.c.b16 %v151, %v143
    %v168 = vpack.c.b16 %v152, %v144
    %v169 = vpack.c.b16 %v153, %v145
    %v170 = vpack.c.b16 %v154, %v146
    %vm187 = vcmask 261120
    %v189 = vsel %vm187, %v48, 0
    %191 = vmatprep.subr.bf16.mxu0 0
    %192 = vmatpush1.bf16.msra.mxu0 0
    %193 = vmatprep.subr.bf16.mxu0 0
    %194 = vmatpush1.bf16.msra.mxu0 0
    %195 = vmatprep.subr.bf16.mxu0 0
    %196 = vmatpush1.bf16.msra.mxu0 0
    %197 = vmatprep.subr.bf16.mxu0 0
    %198 = vmatpush1.bf16.msra.mxu0 0
    %199 = vmatprep.subr.bf16.mxu0 0
    %200 = vmatpush1.bf16.msra.mxu0 0
    %201 = vmatprep.subr.bf16.mxu0 0
    %202 = vmatpush1.bf16.msra.mxu0 0
    %203 = vmatprep.subr.bf16.mxu0 %v164
    %204 = vmatpush1.bf16.msra.mxu0 %v163
    %205 = vmatprep.subr.bf16.mxu0 %v156
    %206 = vmatpush1.bf16.msra.mxu0 %v155
    %207 = vmatprep.subr.bf16.mxu0 0
    %208 = vmatpush2.bf16.msra.mxu0 0
    %209 = vmatprep.subr.bf16.mxu0 0
    %210 = vmatpush2.bf16.msra.mxu0 0
    %211 = vmatprep.subr.bf16.mxu0 0
    %212 = vmatpush2.bf16.msra.mxu0 0
    %213 = vmatprep.subr.bf16.mxu0 0
    %214 = vmatpush2.bf16.msra.mxu0 0
    %215 = vmatprep.subr.bf16.mxu0 0
    %216 = vmatpush2.bf16.msra.mxu0 0
    %217 = vmatprep.subr.bf16.mxu0 0
    %218 = vmatpush2.bf16.msra.mxu0 0
    %219 = vmatprep.subr.bf16.mxu0 0
    %220 = vmatpush2.bf16.msra.mxu0 0
    %221 = vmatprep.subr.bf16.mxu0 0
    %222 = vmatpush2.bf16.msra.mxu0 0
    %223 = vmatprep.mubr.bf16.mxu0 0
    %224 = vmatmul.mubr.bf16.gmra.mxu0 %v189
    %v225 = vpop.f32.mrf.mxu0
    %v226 = vadd.f32 %v70, %v225
    %v227 = vpop.f32.mrf.mxu0
    %v228 = vadd.f32 %v74, %v227
    %v229 = vpop.f32.mrf.mxu0
    %v230 = vpop.f32.mrf.mxu0
    %231 = vdwg.mxu0
    %232 = vmatprep.subr.bf16.mxu0 0
    %233 = vmatpush1.bf16.msra.mxu0 0
    %234 = vmatprep.subr.bf16.mxu0 0
    %235 = vmatpush1.bf16.msra.mxu0 0
    %236 = vmatprep.subr.bf16.mxu0 0
    %237 = vmatpush1.bf16.msra.mxu0 0
    %238 = vmatprep.subr.bf16.mxu0 0
    %239 = vmatpush1.bf16.msra.mxu0 0
    %240 = vmatprep.subr.bf16.mxu0 0
    %241 = vmatpush1.bf16.msra.mxu0 0
    %242 = vmatprep.subr.bf16.mxu0 0
    %243 = vmatpush1.bf16.msra.mxu0 0
    %244 = vmatprep.subr.bf16.mxu0 %v166
    %245 = vmatpush1.bf16.msra.mxu0 %v165
    %246 = vmatprep.subr.bf16.mxu0 %v158
    %247 = vmatpush1.bf16.msra.mxu0 %v157
    %248 = vmatprep.subr.bf16.mxu0 0
    %249 = vmatpush2.bf16.msra.mxu0 0
    %250 = vmatprep.subr.bf16.mxu0 0
    %251 = vmatpush2.bf16.msra.mxu0 0
    %252 = vmatprep.subr.bf16.mxu0 0
    %253 = vmatpush2.bf16.msra.mxu0 0
    %254 = vmatprep.subr.bf16.mxu0 0
    %255 = vmatpush2.bf16.msra.mxu0 0
    %256 = vmatprep.subr.bf16.mxu0 0
    %257 = vmatpush2.bf16.msra.mxu0 0
    %258 = vmatprep.subr.bf16.mxu0 0
    %259 = vmatpush2.bf16.msra.mxu0 0
    %260 = vmatprep.subr.bf16.mxu0 0
    %261 = vmatpush2.bf16.msra.mxu0 0
    %262 = vmatprep.subr.bf16.mxu0 0
    %263 = vmatpush2.bf16.msra.mxu0 0
    %264 = vmatprep.mubr.bf16.mxu0 0
    %265 = vmatmul.mubr.bf16.gmra.mxu0 %v189
    %v266 = vpop.f32.mrf.mxu0
    %v267 = vadd.f32 %v78, %v266
    %v268 = vpop.f32.mrf.mxu0
    %v269 = vadd.f32 %v82, %v268
    %v270 = vpop.f32.mrf.mxu0
    %v271 = vpop.f32.mrf.mxu0
    %272 = vdwg.mxu0
    %273 = vmatprep.subr.bf16.mxu0 0
    %274 = vmatpush1.bf16.msra.mxu0 0
    %275 = vmatprep.subr.bf16.mxu0 0
    %276 = vmatpush1.bf16.msra.mxu0 0
    %277 = vmatprep.subr.bf16.mxu0 0
    %278 = vmatpush1.bf16.msra.mxu0 0
    %279 = vmatprep.subr.bf16.mxu0 0
    %280 = vmatpush1.bf16.msra.mxu0 0
    %281 = vmatprep.subr.bf16.mxu0 0
    %282 = vmatpush1.bf16.msra.mxu0 0
    %283 = vmatprep.subr.bf16.mxu0 0
    %284 = vmatpush1.bf16.msra.mxu0 0
    %285 = vmatprep.subr.bf16.mxu0 %v168
    %286 = vmatpush1.bf16.msra.mxu0 %v167
    %287 = vmatprep.subr.bf16.mxu0 %v160
    %288 = vmatpush1.bf16.msra.mxu0 %v159
    %289 = vmatprep.subr.bf16.mxu0 0
    %290 = vmatpush2.bf16.msra.mxu0 0
    %291 = vmatprep.subr.bf16.mxu0 0
    %292 = vmatpush2.bf16.msra.mxu0 0
    %293 = vmatprep.subr.bf16.mxu0 0
    %294 = vmatpush2.bf16.msra.mxu0 0
    %295 = vmatprep.subr.bf16.mxu0 0
    %296 = vmatpush2.bf16.msra.mxu0 0
    %297 = vmatprep.subr.bf16.mxu0 0
    %298 = vmatpush2.bf16.msra.mxu0 0
    %299 = vmatprep.subr.bf16.mxu0 0
    %300 = vmatpush2.bf16.msra.mxu0 0
    %301 = vmatprep.subr.bf16.mxu0 0
    %302 = vmatpush2.bf16.msra.mxu0 0
    %303 = vmatprep.subr.bf16.mxu0 0
    %304 = vmatpush2.bf16.msra.mxu0 0
    %305 = vmatprep.mubr.bf16.mxu0 0
    %306 = vmatmul.mubr.bf16.gmra.mxu0 %v189
    %v307 = vpop.f32.mrf.mxu0
    %v308 = vadd.f32 %v86, %v307
    %v309 = vpop.f32.mrf.mxu0
    %v310 = vadd.f32 %v90, %v309
    %v311 = vpop.f32.mrf.mxu0
    %v312 = vpop.f32.mrf.mxu0
    %313 = vdwg.mxu0
    %314 = vmatprep.subr.bf16.mxu0 0
    %315 = vmatpush1.bf16.msra.mxu0 0
    %316 = vmatprep.subr.bf16.mxu0 0
    %317 = vmatpush1.bf16.msra.mxu0 0
    %318 = vmatprep.subr.bf16.mxu0 0
    %319 = vmatpush1.bf16.msra.mxu0 0
    %320 = vmatprep.subr.bf16.mxu0 0
    %321 = vmatpush1.bf16.msra.mxu0 0
    %322 = vmatprep.subr.bf16.mxu0 0
    %323 = vmatpush1.bf16.msra.mxu0 0
    %324 = vmatprep.subr.bf16.mxu0 0
    %325 = vmatpush1.bf16.msra.mxu0 0
    %326 = vmatprep.subr.bf16.mxu0 %v170
    %327 = vmatpush1.bf16.msra.mxu0 %v169
    %328 = vmatprep.subr.bf16.mxu0 %v162
    %329 = vmatpush1.bf16.msra.mxu0 %v161
    %330 = vmatprep.subr.bf16.mxu0 0
    %331 = vmatpush2.bf16.msra.mxu0 0
    %332 = vmatprep.subr.bf16.mxu0 0
    %333 = vmatpush2.bf16.msra.mxu0 0
    %334 = vmatprep.subr.bf16.mxu0 0
    %335 = vmatpush2.bf16.msra.mxu0 0
    %336 = vmatprep.subr.bf16.mxu0 0
    %337 = vmatpush2.bf16.msra.mxu0 0
    %338 = vmatprep.subr.bf16.mxu0 0
    %339 = vmatpush2.bf16.msra.mxu0 0
    %340 = vmatprep.subr.bf16.mxu0 0
    %341 = vmatpush2.bf16.msra.mxu0 0
    %342 = vmatprep.subr.bf16.mxu0 0
    %343 = vmatpush2.bf16.msra.mxu0 0
    %344 = vmatprep.subr.bf16.mxu0 0
    %345 = vmatpush2.bf16.msra.mxu0 0
    %346 = vmatprep.mubr.bf16.mxu0 0
    %347 = vmatmul.mubr.bf16.gmra.mxu0 %v189
    %v348 = vpop.f32.mrf.mxu0
    %v349 = vadd.f32 %v94, %v348
    %v350 = vpop.f32.mrf.mxu0
    %v351 = vadd.f32 %v98, %v350
    %v352 = vpop.f32.mrf.mxu0
    %v353 = vpop.f32.mrf.mxu0
    %354 = vdwg.mxu0
    %v355 = vmax.f32 %v226, 0.0
    %v356 = vmax.f32 %v228, 0.0
    %v357 = vmax.f32 %v267, 0.0
    %v358 = vmax.f32 %v269, 0.0
    %v359 = vmax.f32 %v308, 0.0
    %v360 = vmax.f32 %v310, 0.0
    %v361 = vmax.f32 %v349, 0.0
    %v362 = vmax.f32 %v351, 0.0
    %v363 = vrot.slane %v355, 4
    %v364 = vadd.f32 %v355, %v363
    %v365 = vrot.slane %v364, 2
    %v366 = vadd.f32 %v364, %v365
    %v367 = vrot.slane %v366, 1
    %v368 = vadd.f32 %v366, %v367
    %v369 = vrot.slane %v356, 4
    %v370 = vadd.f32 %v356, %v369
    %v371 = vrot.slane %v370, 2
    %v372 = vadd.f32 %v370, %v371
    %v373 = vrot.slane %v372, 1
    %v374 = vadd.f32 %v372, %v373
    %v375 = vrot.slane %v357, 4
    %v376 = vadd.f32 %v357, %v375
    %v377 = vrot.slane %v376, 2
    %v378 = vadd.f32 %v376, %v377
    %v379 = vrot.slane %v378, 1
    %v380 = vadd.f32 %v378, %v379
    %v381 = vrot.slane %v358, 4
    %v382 = vadd.f32 %v358, %v381
    %v383 = vrot.slane %v382, 2
    %v384 = vadd.f32 %v382, %v383
    %v385 = vrot.slane %v384, 1
    %v386 = vadd.f32 %v384, %v385
    %v387 = vrot.slane %v359, 4
    %v388 = vadd.f32 %v359, %v387
    %v389 = vrot.slane %v388, 2
    %v390 = vadd.f32 %v388, %v389
    %v391 = vrot.slane %v390, 1
    %v392 = vadd.f32 %v390, %v391
    %v393 = vrot.slane %v360, 4
    %v394 = vadd.f32 %v360, %v393
    %v395 = vrot.slane %v394, 2
    %v396 = vadd.f32 %v394, %v395
    %v397 = vrot.slane %v396, 1
    %v398 = vadd.f32 %v396, %v397
    %v399 = vrot.slane %v361, 4
    %v400 = vadd.f32 %v361, %v399
    %v401 = vrot.slane %v400, 2
    %v402 = vadd.f32 %v400, %v401
    %v403 = vrot.slane %v402, 1
    %v404 = vadd.f32 %v402, %v403
    %v405 = vrot.slane %v362, 4
    %v406 = vadd.f32 %v362, %v405
    %v407 = vrot.slane %v406, 2
    %v408 = vadd.f32 %v406, %v407
    %v409 = vrot.slane %v408, 1
    %v410 = vadd.f32 %v408, %v409
    %v411 = vmul.f32 %v355, %v355
    %v412 = vmul.f32 %v356, %v356
    %v413 = vmul.f32 %v357, %v357
    %v414 = vmul.f32 %v358, %v358
    %v415 = vmul.f32 %v359, %v359
    %v416 = vmul.f32 %v360, %v360
    %v417 = vmul.f32 %v361, %v361
    %v418 = vmul.f32 %v362, %v362
    %v419 = vrot.slane %v411, 4
    %v420 = vadd.f32 %v411, %v419
    %v421 = vrot.slane %v420, 2
    %v422 = vadd.f32 %v420, %v421
    %v423 = vrot.slane %v422, 1
    %v424 = vadd.f32 %v422, %v423
    %v425 = vrot.slane %v412, 4
    %v426 = vadd.f32 %v412, %v425
    %v427 = vrot.slane %v426, 2
    %v428 = vadd.f32 %v426, %v427
    %v429 = vrot.slane %v428, 1
    %v430 = vadd.f32 %v428, %v429
    %v431 = vrot.slane %v413, 4
    %v432 = vadd.f32 %v413, %v431
    %v433 = vrot.slane %v432, 2
    %v434 = vadd.f32 %v432, %v433
    %v435 = vrot.slane %v434, 1
    %v436 = vadd.f32 %v434, %v435
    %v437 = vrot.slane %v414, 4
    %v438 = vadd.f32 %v414, %v437
    %v439 = vrot.slane %v438, 2
    %v440 = vadd.f32 %v438, %v439
    %v441 = vrot.slane %v440, 1
    %v442 = vadd.f32 %v440, %v441
    %v443 = vrot.slane %v415, 4
    %v444 = vadd.f32 %v415, %v443
    %v445 = vrot.slane %v444, 2
    %v446 = vadd.f32 %v444, %v445
    %v447 = vrot.slane %v446, 1
    %v448 = vadd.f32 %v446, %v447
    %v449 = vrot.slane %v416, 4
    %v450 = vadd.f32 %v416, %v449
    %v451 = vrot.slane %v450, 2
    %v452 = vadd.f32 %v450, %v451
    %v453 = vrot.slane %v452, 1
    %v454 = vadd.f32 %v452, %v453
    %v455 = vrot.slane %v417, 4
    %v456 = vadd.f32 %v417, %v455
    %v457 = vrot.slane %v456, 2
    %v458 = vadd.f32 %v456, %v457
    %v459 = vrot.slane %v458, 1
    %v460 = vadd.f32 %v458, %v459
    %v461 = vrot.slane %v418, 4
    %v462 = vadd.f32 %v418, %v461
    %v463 = vrot.slane %v462, 2
    %v464 = vadd.f32 %v462, %v463
    %v465 = vrot.slane %v464, 1
    %v466 = vadd.f32 %v464, %v465
    %vm467 = vcmask 1040384
    %v468 = vsel %vm467, %v368, %v424
    %v469 = vsel %vm467, %v374, %v430
    %v470 = vsel %vm467, %v380, %v436
    %v471 = vsel %vm467, %v386, %v442
    %v472 = vsel %vm467, %v392, %v448
    %v473 = vsel %vm467, %v398, %v454
    %v474 = vsel %vm467, %v404, %v460
    %v475 = vsel %vm467, %v410, %v466
    %v476 = vld [vmem:[%s3] sm:$0xff]
    %v477 = vld [vmem:[%s3 + $0x8] sm:$0xff]
    %v486 = vcombine.low %v468, %v469
    %v487 = vcombine.low %v470, %v471
    %v489 = vunpack.c.l.s4 1983009808
    %v490 = vunpack.c.0.s8 %v489
    %v491 = vlaneseq
    %v492 = vshrl.u32 %v491, 7
    %v493 = vsub.s32 %v490, %v492
    %v494 = vrot.slane %v486, %v493
    %v496 = vunpack.c.l.s4 1983009808
    %v497 = vunpack.c.0.s8 %v496
    %v498 = vlaneseq
    %v499 = vshrl.u32 %v498, 7
    %v500 = vsub.s32 %v497, %v499
    %v501 = vrot.slane %v487, %v500
    %v502 = vcombine.low %v494, %v501
    %v503 = vcombine.low %v472, %v473
    %v504 = vcombine.low %v474, %v475
    %v506 = vunpack.c.l.s4 1983009808
    %v507 = vunpack.c.0.s8 %v506
    %v508 = vlaneseq
    %v509 = vshrl.u32 %v508, 7
    %v510 = vsub.s32 %v507, %v509
    %v511 = vrot.slane %v503, %v510
    %v513 = vunpack.c.l.s4 1983009808
    %v514 = vunpack.c.0.s8 %v513
    %v515 = vlaneseq
    %v516 = vshrl.u32 %v515, 7
    %v517 = vsub.s32 %v514, %v516
    %v518 = vrot.slane %v504, %v517
    %v519 = vcombine.low %v511, %v518
    %v522 = vadd.f32 %v476, %v502
    %v523 = vadd.f32 %v477, %v519
    %524 = vst [vmem:[%s3] sm:$0xff] %v522
    %525 = vst [vmem:[%s3 + $0x8] sm:$0xff] %v523
    // Predicated region
    $region26: #{ctrnet_forward.2} parent=1 // pred_check
      _
    $region27: #{ctrnet_forward.2} parent=1 // pred_check_branch
      %527 = sbr.rel (0) target = $region29
    $region28: #{ctrnet_forward.2} parent=1 // pred_region
      _
    $region29: #{ctrnet_forward.2} parent=1 // pred_fallthru
      _
    // Predicated region
    $region30: #{ctrnet_forward.2} parent=1 // pred_check
      _
    $region31: #{ctrnet_forward.2} parent=1 // pred_check_branch
      %529 = sbr.rel (0) target = $region33
    $region32: #{ctrnet_forward.2} parent=1 // pred_region
      _
    $region33: #{ctrnet_forward.2} parent=1 // pred_fallthru
      _
    %530 = vsyncpa [#allocation3], 1
    %531 = vsyncpa [#allocation5], 1

// kernel: ctrnet_forward.3
$region0: #{ctrnet_forward.3}
  #allocation0 [shape = 'u32[]', space=smem, size = 0x4, offset = 0x4, fixed_abs, tag = 'smem constant byte address 0x4 - core index']
  #allocation1 [shape = 'u32[144,128]{1,0:T(1,128)}', space=vmem, size = 0x12000, scoped, tag = 'internal scratch']
  %s0 = inlined_call_operand.vmem [shape: f32[8,32], index: 0, kind: input, shape index: {}]
  %s1 = inlined_call_operand.vmem [shape: bf16[32,1024], index: 1, kind: input, shape index: {}]
  %s2 = inlined_call_operand.vmem [shape: f32[1,1024], index: 2, kind: input, shape index: {}]
  %s3 = inlined_call_operand.vmem [shape: bf16[1024,16], index: 3, kind: input, shape index: {}]
  %s4 = inlined_call_operand.vmem [shape: f32[1,16], index: 4, kind: input, shape index: {}]
  %s5 = inlined_call_operand.hbm [shape: f32[8,16], index: 5, kind: output, shape index: {}]
  %s6 = sld [smem:[#allocation0]]
  $region30: #{ctrnet_forward.3} parent=0
    _
  %s8 = ssub.s32 1, %s6
  %s9 = scalar_select 0, %s8, %s6
  $region1: #{ctrnet_forward.3} parent=0
    #allocation2 [shape = 'u8[4096]{0}', space=vmem, size = 0x1000, scoped, tag = 'output window, operand 0, single buffered']
    #allocation3 [shape = 's32[1]{0}', space=sflag, size = 0x4, scoped, tag = 'scoped memory for ctrnet_forward.3']
    %10 = vsyncpa [#allocation3], 0
    // Predicated region
    $region2: #{ctrnet_forward.3} parent=1 // pred_check
      _
    $region3: #{ctrnet_forward.3} parent=1 // pred_check_branch
      %12 = sbr.rel (0) target = $region5
    $region4: #{ctrnet_forward.3} parent=1 // pred_region
      _
    $region5: #{ctrnet_forward.3} parent=1 // pred_fallthru
      _
    // Predicated region
    $region6: #{ctrnet_forward.3} parent=1 // pred_check
      _
    $region7: #{ctrnet_forward.3} parent=1 // pred_check_branch
      %14 = sbr.rel (0) target = $region9
    $region8: #{ctrnet_forward.3} parent=1 // pred_region
      _
    $region9: #{ctrnet_forward.3} parent=1 // pred_fallthru
      _
    // Predicated region
    $region10: #{ctrnet_forward.3} parent=1 // pred_check
      _
    $region11: #{ctrnet_forward.3} parent=1 // pred_check_branch
      %16 = sbr.rel (0) target = $region13
    $region12: #{ctrnet_forward.3} parent=1 // pred_region
      _
    $region13: #{ctrnet_forward.3} parent=1 // pred_fallthru
      _
    // Predicated region
    $region14: #{ctrnet_forward.3} parent=1 // pred_check
      _
    $region15: #{ctrnet_forward.3} parent=1 // pred_check_branch
      %18 = sbr.rel (0) target = $region17
    $region16: #{ctrnet_forward.3} parent=1 // pred_region
      _
    $region17: #{ctrnet_forward.3} parent=1 // pred_fallthru
      _
    // Predicated region
    $region18: #{ctrnet_forward.3} parent=1 // pred_check
      _
    $region19: #{ctrnet_forward.3} parent=1 // pred_check_branch
      %20 = sbr.rel (0) target = $region21
    $region20: #{ctrnet_forward.3} parent=1 // pred_region
      _
    $region21: #{ctrnet_forward.3} parent=1 // pred_fallthru
      _
    %v22 = vld [vmem:[%s0] sm:$0xff]
    %v23 = vpack.c.bf16 %v22, %v22
    %v24 = vld [vmem:[%s1] sm:$0xff]
    %v25 = vld [vmem:[%s1 + $0x8] sm:$0xff]
    %v26 = vld [vmem:[%s1 + $0x10] sm:$0xff]
    %v27 = vld [vmem:[%s1 + $0x18] sm:$0xff]
    %v28 = vld [vmem:[%s1 + $0x20] sm:$0xff]
    %v29 = vld [vmem:[%s1 + $0x28] sm:$0xff]
    %v30 = vld [vmem:[%s1 + $0x30] sm:$0xff]
    %v31 = vld [vmem:[%s1 + $0x38] sm:$0xff]
    %v32 = vld [vmem:[%s1 + $0x40] sm:$0xff]
    %v33 = vld [vmem:[%s1 + $0x48] sm:$0xff]
    %v34 = vld [vmem:[%s1 + $0x50] sm:$0xff]
    %v35 = vld [vmem:[%s1 + $0x58] sm:$0xff]
    %v36 = vld [vmem:[%s1 + $0x60] sm:$0xff]
    %v37 = vld [vmem:[%s1 + $0x68] sm:$0xff]
    %v38 = vld [vmem:[%s1 + $0x70] sm:$0xff]
    %v39 = vld [vmem:[%s1 + $0x78] sm:$0xff]
    %v40 = vld [vmem:[%s2] sm:$0xff]
    %v42 = vlaneseq
    %v43 = vshrl.u32 %v42, 7
    %v44 = vsub.s32 0, %v43
    %v45 = vrot.slane %v40, %v44
    %v46 = vlaneseq
    %v47 = vshrl.u32 %v46, 7
    %v48 = vsub.s32 1, %v47
    %v49 = vrot.slane %v40, %v48
    %v50 = vlaneseq
    %v51 = vshrl.u32 %v50, 7
    %v52 = vsub.s32 2, %v51
    %v53 = vrot.slane %v40, %v52
    %v54 = vlaneseq
    %v55 = vshrl.u32 %v54, 7
    %v56 = vsub.s32 3, %v55
    %v57 = vrot.slane %v40, %v56
    %v58 = vlaneseq
    %v59 = vshrl.u32 %v58, 7
    %v60 = vsub.s32 4, %v59
    %v61 = vrot.slane %v40, %v60
    %v62 = vlaneseq
    %v63 = vshrl.u32 %v62, 7
    %v64 = vsub.s32 5, %v63
    %v65 = vrot.slane %v40, %v64
    %v66 = vlaneseq
    %v67 = vshrl.u32 %v66, 7
    %v68 = vsub.s32 6, %v67
    %v69 = vrot.slane %v40, %v68
    %v70 = vlaneseq
    %v71 = vshrl.u32 %v70, 7
    %v72 = vsub.s32 7, %v71
    %v73 = vrot.slane %v40, %v72
    %v98 = vunpack.c.l.b16 %v24
    %v99 = vunpack.c.h.b16 %v24
    %v100 = vunpack.c.l.b16 %v25
    %v101 = vunpack.c.h.b16 %v25
    %v102 = vunpack.c.l.b16 %v26
    %v103 = vunpack.c.h.b16 %v26
    %v104 = vunpack.c.l.b16 %v27
    %v105 = vunpack.c.h.b16 %v27
    %v106 = vunpack.c.l.b16 %v28
    %v107 = vunpack.c.h.b16 %v28
    %v108 = vunpack.c.l.b16 %v29
    %v109 = vunpack.c.h.b16 %v29
    %v110 = vunpack.c.l.b16 %v30
    %v111 = vunpack.c.h.b16 %v30
    %v112 = vunpack.c.l.b16 %v31
    %v113 = vunpack.c.h.b16 %v31
    %v114 = vunpack.c.l.b16 %v32
    %v115 = vunpack.c.h.b16 %v32
    %v116 = vunpack.c.l.b16 %v33
    %v117 = vunpack.c.h.b16 %v33
    %v118 = vunpack.c.l.b16 %v34
    %v119 = vunpack.c.h.b16 %v34
    %v120 = vunpack.c.l.b16 %v35
    %v121 = vunpack.c.h.b16 %v35
    %v122 = vunpack.c.l.b16 %v36
    %v123 = vunpack.c.h.b16 %v36
    %v124 = vunpack.c.l.b16 %v37
    %v125 = vunpack.c.h.b16 %v37
    %v126 = vunpack.c.l.b16 %v38
    %v127 = vunpack.c.h.b16 %v38
    %v128 = vunpack.c.l.b16 %v39
    %v129 = vunpack.c.h.b16 %v39
    %v130 = vpack.c.b16 %v106, %v98
    %v131 = vpack.c.b16 %v107, %v99
    %v132 = vpack.c.b16 %v108, %v100
    %v133 = vpack.c.b16 %v109, %v101
    %v134 = vpack.c.b16 %v110, %v102
    %v135 = vpack.c.b16 %v111, %v103
    %v136 = vpack.c.b16 %v112, %v104
    %v137 = vpack.c.b16 %v113, %v105
    %v138 = vpack.c.b16 %v122, %v114
    %v139 = vpack.c.b16 %v123, %v115
    %v140 = vpack.c.b16 %v124, %v116
    %v141 = vpack.c.b16 %v125, %v117
    %v142 = vpack.c.b16 %v126, %v118
    %v143 = vpack.c.b16 %v127, %v119
    %v144 = vpack.c.b16 %v128, %v120
    %v145 = vpack.c.b16 %v129, %v121
    %vm162 = vcmask 261120
    %v164 = vsel %vm162, %v23, 0
    %166 = vmatprep.subr.bf16.mxu0 0
    %167 = vmatpush1.bf16.msra.mxu0 0
    %168 = vmatprep.subr.bf16.mxu0 0
    %169 = vmatpush1.bf16.msra.mxu0 0
    %170 = vmatprep.subr.bf16.mxu0 0
    %171 = vmatpush1.bf16.msra.mxu0 0
    %172 = vmatprep.subr.bf16.mxu0 0
    %173 = vmatpush1.bf16.msra.mxu0 0
    %174 = vmatprep.subr.bf16.mxu0 0
    %175 = vmatpush1.bf16.msra.mxu0 0
    %176 = vmatprep.subr.bf16.mxu0 0
    %177 = vmatpush1.bf16.msra.mxu0 0
    %178 = vmatprep.subr.bf16.mxu0 %v139
    %179 = vmatpush1.bf16.msra.mxu0 %v138
    %180 = vmatprep.subr.bf16.mxu0 %v131
    %181 = vmatpush1.bf16.msra.mxu0 %v130
    %182 = vmatprep.subr.bf16.mxu0 0
    %183 = vmatpush2.bf16.msra.mxu0 0
    %184 = vmatprep.subr.bf16.mxu0 0
    %185 = vmatpush2.bf16.msra.mxu0 0
    %186 = vmatprep.subr.bf16.mxu0 0
    %187 = vmatpush2.bf16.msra.mxu0 0
    %188 = vmatprep.subr.bf16.mxu0 0
    %189 = vmatpush2.bf16.msra.mxu0 0
    %190 = vmatprep.subr.bf16.mxu0 0
    %191 = vmatpush2.bf16.msra.mxu0 0
    %192 = vmatprep.subr.bf16.mxu0 0
    %193 = vmatpush2.bf16.msra.mxu0 0
    %194 = vmatprep.subr.bf16.mxu0 0
    %195 = vmatpush2.bf16.msra.mxu0 0
    %196 = vmatprep.subr.bf16.mxu0 0
    %197 = vmatpush2.bf16.msra.mxu0 0
    %198 = vmatprep.mubr.bf16.mxu0 0
    %199 = vmatmul.mubr.bf16.gmra.mxu0 %v164
    %v200 = vpop.f32.mrf.mxu0
    %v201 = vadd.f32 %v45, %v200
    %v202 = vpop.f32.mrf.mxu0
    %v203 = vadd.f32 %v49, %v202
    %v204 = vpop.f32.mrf.mxu0
    %v205 = vpop.f32.mrf.mxu0
    %206 = vdwg.mxu0
    %207 = vmatprep.subr.bf16.mxu0 0
    %208 = vmatpush1.bf16.msra.mxu0 0
    %209 = vmatprep.subr.bf16.mxu0 0
    %210 = vmatpush1.bf16.msra.mxu0 0
    %211 = vmatprep.subr.bf16.mxu0 0
    %212 = vmatpush1.bf16.msra.mxu0 0
    %213 = vmatprep.subr.bf16.mxu0 0
    %214 = vmatpush1.bf16.msra.mxu0 0
    %215 = vmatprep.subr.bf16.mxu0 0
    %216 = vmatpush1.bf16.msra.mxu0 0
    %217 = vmatprep.subr.bf16.mxu0 0
    %218 = vmatpush1.bf16.msra.mxu0 0
    %219 = vmatprep.subr.bf16.mxu0 %v141
    %220 = vmatpush1.bf16.msra.mxu0 %v140
    %221 = vmatprep.subr.bf16.mxu0 %v133
    %222 = vmatpush1.bf16.msra.mxu0 %v132
    %223 = vmatprep.subr.bf16.mxu0 0
    %224 = vmatpush2.bf16.msra.mxu0 0
    %225 = vmatprep.subr.bf16.mxu0 0
    %226 = vmatpush2.bf16.msra.mxu0 0
    %227 = vmatprep.subr.bf16.mxu0 0
    %228 = vmatpush2.bf16.msra.mxu0 0
    %229 = vmatprep.subr.bf16.mxu0 0
    %230 = vmatpush2.bf16.msra.mxu0 0
    %231 = vmatprep.subr.bf16.mxu0 0
    %232 = vmatpush2.bf16.msra.mxu0 0
    %233 = vmatprep.subr.bf16.mxu0 0
    %234 = vmatpush2.bf16.msra.mxu0 0
    %235 = vmatprep.subr.bf16.mxu0 0
    %236 = vmatpush2.bf16.msra.mxu0 0
    %237 = vmatprep.subr.bf16.mxu0 0
    %238 = vmatpush2.bf16.msra.mxu0 0
    %239 = vmatprep.mubr.bf16.mxu0 0
    %240 = vmatmul.mubr.bf16.gmra.mxu0 %v164
    %v241 = vpop.f32.mrf.mxu0
    %v242 = vadd.f32 %v53, %v241
    %v243 = vpop.f32.mrf.mxu0
    %v244 = vadd.f32 %v57, %v243
    %v245 = vpop.f32.mrf.mxu0
    %v246 = vpop.f32.mrf.mxu0
    %247 = vdwg.mxu0
    %248 = vmatprep.subr.bf16.mxu0 0
    %249 = vmatpush1.bf16.msra.mxu0 0
    %250 = vmatprep.subr.bf16.mxu0 0
    %251 = vmatpush1.bf16.msra.mxu0 0
    %252 = vmatprep.subr.bf16.mxu0 0
    %253 = vmatpush1.bf16.msra.mxu0 0
    %254 = vmatprep.subr.bf16.mxu0 0
    %255 = vmatpush1.bf16.msra.mxu0 0
    %256 = vmatprep.subr.bf16.mxu0 0
    %257 = vmatpush1.bf16.msra.mxu0 0
    %258 = vmatprep.subr.bf16.mxu0 0
    %259 = vmatpush1.bf16.msra.mxu0 0
    %260 = vmatprep.subr.bf16.mxu0 %v143
    %261 = vmatpush1.bf16.msra.mxu0 %v142
    %262 = vmatprep.subr.bf16.mxu0 %v135
    %263 = vmatpush1.bf16.msra.mxu0 %v134
    %264 = vmatprep.subr.bf16.mxu0 0
    %265 = vmatpush2.bf16.msra.mxu0 0
    %266 = vmatprep.subr.bf16.mxu0 0
    %267 = vmatpush2.bf16.msra.mxu0 0
    %268 = vmatprep.subr.bf16.mxu0 0
    %269 = vmatpush2.bf16.msra.mxu0 0
    %270 = vmatprep.subr.bf16.mxu0 0
    %271 = vmatpush2.bf16.msra.mxu0 0
    %272 = vmatprep.subr.bf16.mxu0 0
    %273 = vmatpush2.bf16.msra.mxu0 0
    %274 = vmatprep.subr.bf16.mxu0 0
    %275 = vmatpush2.bf16.msra.mxu0 0
    %276 = vmatprep.subr.bf16.mxu0 0
    %277 = vmatpush2.bf16.msra.mxu0 0
    %278 = vmatprep.subr.bf16.mxu0 0
    %279 = vmatpush2.bf16.msra.mxu0 0
    %280 = vmatprep.mubr.bf16.mxu0 0
    %281 = vmatmul.mubr.bf16.gmra.mxu0 %v164
    %v282 = vpop.f32.mrf.mxu0
    %v283 = vadd.f32 %v61, %v282
    %v284 = vpop.f32.mrf.mxu0
    %v285 = vadd.f32 %v65, %v284
    %v286 = vpop.f32.mrf.mxu0
    %v287 = vpop.f32.mrf.mxu0
    %288 = vdwg.mxu0
    %289 = vmatprep.subr.bf16.mxu0 0
    %290 = vmatpush1.bf16.msra.mxu0 0
    %291 = vmatprep.subr.bf16.mxu0 0
    %292 = vmatpush1.bf16.msra.mxu0 0
    %293 = vmatprep.subr.bf16.mxu0 0
    %294 = vmatpush1.bf16.msra.mxu0 0
    %295 = vmatprep.subr.bf16.mxu0 0
    %296 = vmatpush1.bf16.msra.mxu0 0
    %297 = vmatprep.subr.bf16.mxu0 0
    %298 = vmatpush1.bf16.msra.mxu0 0
    %299 = vmatprep.subr.bf16.mxu0 0
    %300 = vmatpush1.bf16.msra.mxu0 0
    %301 = vmatprep.subr.bf16.mxu0 %v145
    %302 = vmatpush1.bf16.msra.mxu0 %v144
    %303 = vmatprep.subr.bf16.mxu0 %v137
    %304 = vmatpush1.bf16.msra.mxu0 %v136
    %305 = vmatprep.subr.bf16.mxu0 0
    %306 = vmatpush2.bf16.msra.mxu0 0
    %307 = vmatprep.subr.bf16.mxu0 0
    %308 = vmatpush2.bf16.msra.mxu0 0
    %309 = vmatprep.subr.bf16.mxu0 0
    %310 = vmatpush2.bf16.msra.mxu0 0
    %311 = vmatprep.subr.bf16.mxu0 0
    %312 = vmatpush2.bf16.msra.mxu0 0
    %313 = vmatprep.subr.bf16.mxu0 0
    %314 = vmatpush2.bf16.msra.mxu0 0
    %315 = vmatprep.subr.bf16.mxu0 0
    %316 = vmatpush2.bf16.msra.mxu0 0
    %317 = vmatprep.subr.bf16.mxu0 0
    %318 = vmatpush2.bf16.msra.mxu0 0
    %319 = vmatprep.subr.bf16.mxu0 0
    %320 = vmatpush2.bf16.msra.mxu0 0
    %321 = vmatprep.mubr.bf16.mxu0 0
    %322 = vmatmul.mubr.bf16.gmra.mxu0 %v164
    %v323 = vpop.f32.mrf.mxu0
    %v324 = vadd.f32 %v69, %v323
    %v325 = vpop.f32.mrf.mxu0
    %v326 = vadd.f32 %v73, %v325
    %v327 = vpop.f32.mrf.mxu0
    %v328 = vpop.f32.mrf.mxu0
    %329 = vdwg.mxu0
    %v330 = vmax.f32 %v201, 0.0
    %v331 = vmax.f32 %v203, 0.0
    %v332 = vmax.f32 %v242, 0.0
    %v333 = vmax.f32 %v244, 0.0
    %v334 = vmax.f32 %v283, 0.0
    %v335 = vmax.f32 %v285, 0.0
    %v336 = vmax.f32 %v324, 0.0
    %v337 = vmax.f32 %v326, 0.0
    %v338 = vpack.c.bf16 %v330, %v330
    %v339 = vpack.c.bf16 %v331, %v331
    %v340 = vpack.c.bf16 %v332, %v332
    %v341 = vpack.c.bf16 %v333, %v333
    %v342 = vpack.c.bf16 %v334, %v334
    %v343 = vpack.c.bf16 %v335, %v335
    %v344 = vpack.c.bf16 %v336, %v336
    %v345 = vpack.c.bf16 %v337, %v337
    %v346 = vld [vmem:[%s3] sm:$0xf]
    %v347 = vld [vmem:[%s3 + $0x4] sm:$0xf]
    %v348 = vld [vmem:[%s3 + $0x8] sm:$0xf]
    %v349 = vld [vmem:[%s3 + $0xc] sm:$0xf]
    %v350 = vld [vmem:[%s3 + $0x10] sm:$0xf]
    %v351 = vld [vmem:[%s3 + $0x14] sm:$0xf]
    %v352 = vld [vmem:[%s3 + $0x18] sm:$0xf]
    %v353 = vld [vmem:[%s3 + $0x1c] sm:$0xf]
    %v354 = vld [vmem:[%s3 + $0x20] sm:$0xf]
    %v355 = vld [vmem:[%s3 + $0x24] sm:$0xf]
    %v356 = vld [vmem:[%s3 + $0x28] sm:$0xf]
    %v357 = vld [vmem:[%s3 + $0x2c] sm:$0xf]
    %v358 = vld [vmem:[%s3 + $0x30] sm:$0xf]
    %v359 = vld [vmem:[%s3 + $0x34] sm:$0xf]
    %v360 = vld [vmem:[%s3 + $0x38] sm:$0xf]
    %v361 = vld [vmem:[%s3 + $0x3c] sm:$0xf]
    %v362 = vld [vmem:[%s3 + $0x40] sm:$0xf]
    %v363 = vld [vmem:[%s3 + $0x44] sm:$0xf]
    %v364 = vld [vmem:[%s3 + $0x48] sm:$0xf]
    %v365 = vld [vmem:[%s3 + $0x4c] sm:$0xf]
    %v366 = vld [vmem:[%s3 + $0x50] sm:$0xf]
    %v367 = vld [vmem:[%s3 + $0x54] sm:$0xf]
    %v368 = vld [vmem:[%s3 + $0x58] sm:$0xf]
    %v369 = vld [vmem:[%s3 + $0x5c] sm:$0xf]
    %v370 = vld [vmem:[%s3 + $0x60] sm:$0xf]
    %v371 = vld [vmem:[%s3 + $0x64] sm:$0xf]
    %v372 = vld [vmem:[%s3 + $0x68] sm:$0xf]
    %v373 = vld [vmem:[%s3 + $0x6c] sm:$0xf]
    %v374 = vld [vmem:[%s3 + $0x70] sm:$0xf]
    %v375 = vld [vmem:[%s3 + $0x74] sm:$0xf]
    %v376 = vld [vmem:[%s3 + $0x78] sm:$0xf]
    %v377 = vld [vmem:[%s3 + $0x7c] sm:$0xf]
    %v378 = vld [vmem:[%s3 + $0x80] sm:$0xf]
    %v379 = vld [vmem:[%s3 + $0x84] sm:$0xf]
    %v380 = vld [vmem:[%s3 + $0x88] sm:$0xf]
    %v381 = vld [vmem:[%s3 + $0x8c] sm:$0xf]
    %v382 = vld [vmem:[%s3 + $0x90] sm:$0xf]
    %v383 = vld [vmem:[%s3 + $0x94] sm:$0xf]
    %v384 = vld [vmem:[%s3 + $0x98] sm:$0xf]
    %v385 = vld [vmem:[%s3 + $0x9c] sm:$0xf]
    %v386 = vld [vmem:[%s3 + $0xa0] sm:$0xf]
    %v387 = vld [vmem:[%s3 + $0xa4] sm:$0xf]
    %v388 = vld [vmem:[%s3 + $0xa8] sm:$0xf]
    %v389 = vld [vmem:[%s3 + $0xac] sm:$0xf]
    %v390 = vld [vmem:[%s3 + $0xb0] sm:$0xf]
    %v391 = vld [vmem:[%s3 + $0xb4] sm:$0xf]
    %v392 = vld [vmem:[%s3 + $0xb8] sm:$0xf]
    %v393 = vld [vmem:[%s3 + $0xbc] sm:$0xf]
    %v394 = vld [vmem:[%s3 + $0xc0] sm:$0xf]
    %v395 = vld [vmem:[%s3 + $0xc4] sm:$0xf]
    %v396 = vld [vmem:[%s3 + $0xc8] sm:$0xf]
    %v397 = vld [vmem:[%s3 + $0xcc] sm:$0xf]
    %v398 = vld [vmem:[%s3 + $0xd0] sm:$0xf]
    %v399 = vld [vmem:[%s3 + $0xd4] sm:$0xf]
    %v400 = vld [vmem:[%s3 + $0xd8] sm:$0xf]
    %v401 = vld [vmem:[%s3 + $0xdc] sm:$0xf]
    %v402 = vld [vmem:[%s3 + $0xe0] sm:$0xf]
    %v403 = vld [vmem:[%s3 + $0xe4] sm:$0xf]
    %v404 = vld [vmem:[%s3 + $0xe8] sm:$0xf]
    %v405 = vld [vmem:[%s3 + $0xec] sm:$0xf]
    %v406 = vld [vmem:[%s3 + $0xf0] sm:$0xf]
    %v407 = vld [vmem:[%s3 + $0xf4] sm:$0xf]
    %v408 = vld [vmem:[%s3 + $0xf8] sm:$0xf]
    %v409 = vld [vmem:[%s3 + $0xfc] sm:$0xf]
    %v410 = vld [vmem:[%s3 + $0x100] sm:$0xf]
    %v411 = vld [vmem:[%s3 + $0x104] sm:$0xf]
    %v412 = vld [vmem:[%s3 + $0x108] sm:$0xf]
    %v413 = vld [vmem:[%s3 + $0x10c] sm:$0xf]
    %v414 = vld [vmem:[%s3 + $0x110] sm:$0xf]
    %v415 = vld [vmem:[%s3 + $0x114] sm:$0xf]
    %v416 = vld [vmem:[%s3 + $0x118] sm:$0xf]
    %v417 = vld [vmem:[%s3 + $0x11c] sm:$0xf]
    %v418 = vld [vmem:[%s3 + $0x120] sm:$0xf]
    %v419 = vld [vmem:[%s3 + $0x124] sm:$0xf]
    %v420 = vld [vmem:[%s3 + $0x128] sm:$0xf]
    %v421 = vld [vmem:[%s3 + $0x12c] sm:$0xf]
    %v422 = vld [vmem:[%s3 + $0x130] sm:$0xf]
    %v423 = vld [vmem:[%s3 + $0x134] sm:$0xf]
    %v424 = vld [vmem:[%s3 + $0x138] sm:$0xf]
    %v425 = vld [vmem:[%s3 + $0x13c] sm:$0xf]
    %v426 = vld [vmem:[%s3 + $0x140] sm:$0xf]
    %v427 = vld [vmem:[%s3 + $0x144] sm:$0xf]
    %v428 = vld [vmem:[%s3 + $0x148] sm:$0xf]
    %v429 = vld [vmem:[%s3 + $0x14c] sm:$0xf]
    %v430 = vld [vmem:[%s3 + $0x150] sm:$0xf]
    %v431 = vld [vmem:[%s3 + $0x154] sm:$0xf]
    %v432 = vld [vmem:[%s3 + $0x158] sm:$0xf]
    %v433 = vld [vmem:[%s3 + $0x15c] sm:$0xf]
    %v434 = vld [vmem:[%s3 + $0x160] sm:$0xf]
    %v435 = vld [vmem:[%s3 + $0x164] sm:$0xf]
    %v436 = vld [vmem:[%s3 + $0x168] sm:$0xf]
    %v437 = vld [vmem:[%s3 + $0x16c] sm:$0xf]
    %v438 = vld [vmem:[%s3 + $0x170] sm:$0xf]
    %v439 = vld [vmem:[%s3 + $0x174] sm:$0xf]
    %v440 = vld [vmem:[%s3 + $0x178] sm:$0xf]
    %v441 = vld [vmem:[%s3 + $0x17c] sm:$0xf]
    %v442 = vld [vmem:[%s3 + $0x180] sm:$0xf]
    %v443 = vld [vmem:[%s3 + $0x184] sm:$0xf]
    %v444 = vld [vmem:[%s3 + $0x188] sm:$0xf]
    %v445 = vld [vmem:[%s3 + $0x18c] sm:$0xf]
    %v446 = vld [vmem:[%s3 + $0x190] sm:$0xf]
    %v447 = vld [vmem:[%s3 + $0x194] sm:$0xf]
    %v448 = vld [vmem:[%s3 + $0x198] sm:$0xf]
    %v449 = vld [vmem:[%s3 + $0x19c] sm:$0xf]
    %v450 = vld [vmem:[%s3 + $0x1a0] sm:$0xf]
    %v451 = vld [vmem:[%s3 + $0x1a4] sm:$0xf]
    %v452 = vld [vmem:[%s3 + $0x1a8] sm:$0xf]
    %v453 = vld [vmem:[%s3 + $0x1ac] sm:$0xf]
    %v454 = vld [vmem:[%s3 + $0x1b0] sm:$0xf]
    %v455 = vld [vmem:[%s3 + $0x1b4] sm:$0xf]
    %v456 = vld [vmem:[%s3 + $0x1b8] sm:$0xf]
    %v457 = vld [vmem:[%s3 + $0x1bc] sm:$0xf]
    %v458 = vld [vmem:[%s3 + $0x1c0] sm:$0xf]
    %v459 = vld [vmem:[%s3 + $0x1c4] sm:$0xf]
    %v460 = vld [vmem:[%s3 + $0x1c8] sm:$0xf]
    %v461 = vld [vmem:[%s3 + $0x1cc] sm:$0xf]
    %v462 = vld [vmem:[%s3 + $0x1d0] sm:$0xf]
    %v463 = vld [vmem:[%s3 + $0x1d4] sm:$0xf]
    %v464 = vld [vmem:[%s3 + $0x1d8] sm:$0xf]
    %v465 = vld [vmem:[%s3 + $0x1dc] sm:$0xf]
    %v466 = vld [vmem:[%s3 + $0x1e0] sm:$0xf]
    %v467 = vld [vmem:[%s3 + $0x1e4] sm:$0xf]
    %v468 = vld [vmem:[%s3 + $0x1e8] sm:$0xf]
    %v469 = vld [vmem:[%s3 + $0x1ec] sm:$0xf]
    %v470 = vld [vmem:[%s3 + $0x1f0] sm:$0xf]
    %v471 = vld [vmem:[%s3 + $0x1f4] sm:$0xf]
    %v472 = vld [vmem:[%s3 + $0x1f8] sm:$0xf]
    %v473 = vld [vmem:[%s3 + $0x1fc] sm:$0xf]
    %v474 = vld [vmem:[%s4] sm:$0x1]
    %v476 = vlaneseq
    %v477 = vshrl.u32 %v476, 7
    %v478 = vsub.s32 0, %v477
    %v479 = vrot.slane %v474, %v478
    %v609 = vunpack.c.l.b16 %v346
    %v610 = vunpack.c.l.b16 %v347
    %v611 = vunpack.c.l.b16 %v348
    %v612 = vunpack.c.l.b16 %v349
    %v613 = vunpack.c.l.b16 %v350
    %v614 = vunpack.c.l.b16 %v351
    %v615 = vunpack.c.l.b16 %v352
    %v616 = vunpack.c.l.b16 %v353
    %v617 = vunpack.c.l.b16 %v354
    %v618 = vunpack.c.l.b16 %v355
    %v619 = vunpack.c.l.b16 %v356
    %v620 = vunpack.c.l.b16 %v357
    %v621 = vunpack.c.l.b16 %v358
    %v622 = vunpack.c.l.b16 %v359
    %v623 = vunpack.c.l.b16 %v360
    %v624 = vunpack.c.l.b16 %v361
    %v625 = vunpack.c.l.b16 %v362
    %v626 = vunpack.c.l.b16 %v363
    %v627 = vunpack.c.l.b16 %v364
    %v628 = vunpack.c.l.b16 %v365
    %v629 = vunpack.c.l.b16 %v366
    %v630 = vunpack.c.l.b16 %v367
    %v631 = vunpack.c.l.b16 %v368
    %v632 = vunpack.c.l.b16 %v369
    %v633 = vunpack.c.l.b16 %v370
    %v634 = vunpack.c.l.b16 %v371
    %v635 = vunpack.c.l.b16 %v372
    %v636 = vunpack.c.l.b16 %v373
    %v637 = vunpack.c.l.b16 %v374
    %v638 = vunpack.c.l.b16 %v375
    %v639 = vunpack.c.l.b16 %v376
    %v640 = vunpack.c.l.b16 %v377
    %v641 = vunpack.c.l.b16 %v378
    %v642 = vunpack.c.l.b16 %v379
    %v643 = vunpack.c.l.b16 %v380
    %v644 = vunpack.c.l.b16 %v381
    %v645 = vunpack.c.l.b16 %v382
    %v646 = vunpack.c.l.b16 %v383
    %v647 = vunpack.c.l.b16 %v384
    %v648 = vunpack.c.l.b16 %v385
    %v649 = vunpack.c.l.b16 %v386
    %v650 = vunpack.c.l.b16 %v387
    %v651 = vunpack.c.l.b16 %v388
    %v652 = vunpack.c.l.b16 %v389
    %v653 = vunpack.c.l.b16 %v390
    %v654 = vunpack.c.l.b16 %v391
    %v655 = vunpack.c.l.b16 %v392
    %v656 = vunpack.c.l.b16 %v393
    %v657 = vunpack.c.l.b16 %v394
    %v658 = vunpack.c.l.b16 %v395
    %v659 = vunpack.c.l.b16 %v396
    %v660 = vunpack.c.l.b16 %v397
    %v661 = vunpack.c.l.b16 %v398
    %v662 = vunpack.c.l.b16 %v399
    %v663 = vunpack.c.l.b16 %v400
    %v664 = vunpack.c.l.b16 %v401
    %v665 = vunpack.c.l.b16 %v402
    %v666 = vunpack.c.l.b16 %v403
    %v667 = vunpack.c.l.b16 %v404
    %v668 = vunpack.c.l.b16 %v405
    %v669 = vunpack.c.l.b16 %v406
    %v670 = vunpack.c.l.b16 %v407
    %v671 = vunpack.c.l.b16 %v408
    %v672 = vunpack.c.l.b16 %v409
    %v673 = vunpack.c.l.b16 %v410
    %v674 = vunpack.c.l.b16 %v411
    %v675 = vunpack.c.l.b16 %v412
    %v676 = vunpack.c.l.b16 %v413
    %v677 = vunpack.c.l.b16 %v414
    %v678 = vunpack.c.l.b16 %v415
    %v679 = vunpack.c.l.b16 %v416
    %v680 = vunpack.c.l.b16 %v417
    %v681 = vunpack.c.l.b16 %v418
    %v682 = vunpack.c.l.b16 %v419
    %v683 = vunpack.c.l.b16 %v420
    %v684 = vunpack.c.l.b16 %v421
    %v685 = vunpack.c.l.b16 %v422
    %v686 = vunpack.c.l.b16 %v423
    %v687 = vunpack.c.l.b16 %v424
    %v688 = vunpack.c.l.b16 %v425
    %v689 = vunpack.c.l.b16 %v426
    %v690 = vunpack.c.l.b16 %v427
    %v691 = vunpack.c.l.b16 %v428
    %v692 = vunpack.c.l.b16 %v429
    %v693 = vunpack.c.l.b16 %v430
    %v694 = vunpack.c.l.b16 %v431
    %v695 = vunpack.c.l.b16 %v432
    %v696 = vunpack.c.l.b16 %v433
    %v697 = vunpack.c.l.b16 %v434
    %v698 = vunpack.c.l.b16 %v435
    %v699 = vunpack.c.l.b16 %v436
    %v700 = vunpack.c.l.b16 %v437
    %v701 = vunpack.c.l.b16 %v438
    %v702 = vunpack.c.l.b16 %v439
    %v703 = vunpack.c.l.b16 %v440
    %v704 = vunpack.c.l.b16 %v441
    %v705 = vunpack.c.l.b16 %v442
    %v706 = vunpack.c.l.b16 %v443
    %v707 = vunpack.c.l.b16 %v444
    %v708 = vunpack.c.l.b16 %v445
    %v709 = vunpack.c.l.b16 %v446
    %v710 = vunpack.c.l.b16 %v447
    %v711 = vunpack.c.l.b16 %v448
    %v712 = vunpack.c.l.b16 %v449
    %v713 = vunpack.c.l.b16 %v450
    %v714 = vunpack.c.l.b16 %v451
    %v715 = vunpack.c.l.b16 %v452
    %v716 = vunpack.c.l.b16 %v453
    %v717 = vunpack.c.l.b16 %v454
    %v718 = vunpack.c.l.b16 %v455
    %v719 = vunpack.c.l.b16 %v456
    %v720 = vunpack.c.l.b16 %v457
    %v721 = vunpack.c.l.b16 %v458
    %v722 = vunpack.c.l.b16 %v459
    %v723 = vunpack.c.l.b16 %v460
    %v724 = vunpack.c.l.b16 %v461
    %v725 = vunpack.c.l.b16 %v462
    %v726 = vunpack.c.l.b16 %v463
    %v727 = vunpack.c.l.b16 %v464
    %v728 = vunpack.c.l.b16 %v465
    %v729 = vunpack.c.l.b16 %v466
    %v730 = vunpack.c.l.b16 %v467
    %v731 = vunpack.c.l.b16 %v468
    %v732 = vunpack.c.l.b16 %v469
    %v733 = vunpack.c.l.b16 %v470
    %v734 = vunpack.c.l.b16 %v471
    %v735 = vunpack.c.l.b16 %v472
    %v736 = vunpack.c.l.b16 %v473
    %v737 = vpack.c.b16 %v610, %v609
    %v738 = vpack.c.b16 %v612, %v611
    %v739 = vpack.c.b16 %v614, %v613
    %v740 = vpack.c.b16 %v616, %v615
    %v741 = vpack.c.b16 %v618, %v617
    %v742 = vpack.c.b16 %v620, %v619
    %v743 = vpack.c.b16 %v622, %v621
    %v744 = vpack.c.b16 %v624, %v623
    %v745 = vpack.c.b16 %v626, %v625
    %v746 = vpack.c.b16 %v628, %v627
    %v747 = vpack.c.b16 %v630, %v629
    %v748 = vpack.c.b16 %v632, %v631
    %v749 = vpack.c.b16 %v634, %v633
    %v750 = vpack.c.b16 %v636, %v635
    %v751 = vpack.c.b16 %v638, %v637
    %v752 = vpack.c.b16 %v640, %v639
    %v753 = vpack.c.b16 %v642, %v641
    %v754 = vpack.c.b16 %v644, %v643
    %v755 = vpack.c.b16 %v646, %v645
    %v756 = vpack.c.b16 %v648, %v647
    %v757 = vpack.c.b16 %v650, %v649
    %v758 = vpack.c.b16 %v652, %v651
    %v759 = vpack.c.b16 %v654, %v653
    %v760 = vpack.c.b16 %v656, %v655
    %v761 = vpack.c.b16 %v658, %v657
    %v762 = vpack.c.b16 %v660, %v659
    %v763 = vpack.c.b16 %v662, %v661
    %v764 = vpack.c.b16 %v664, %v663
    %v765 = vpack.c.b16 %v666, %v665
    %v766 = vpack.c.b16 %v668, %v667
    %v767 = vpack.c.b16 %v670, %v669
    %v768 = vpack.c.b16 %v672, %v671
    %v769 = vpack.c.b16 %v674, %v673
    %v770 = vpack.c.b16 %v676, %v675
    %v771 = vpack.c.b16 %v678, %v677
    %v772 = vpack.c.b16 %v680, %v679
    %v773 = vpack.c.b16 %v682, %v681
    %v774 = vpack.c.b16 %v684, %v683
    %v775 = vpack.c.b16 %v686, %v685
    %v776 = vpack.c.b16 %v688, %v687
    %v777 = vpack.c.b16 %v690, %v689
    %v778 = vpack.c.b16 %v692, %v691
    %v779 = vpack.c.b16 %v694, %v693
    %v780 = vpack.c.b16 %v696, %v695
    %v781 = vpack.c.b16 %v698, %v697
    %v782 = vpack.c.b16 %v700, %v699
    %v783 = vpack.c.b16 %v702, %v701
    %v784 = vpack.c.b16 %v704, %v703
    %v785 = vpack.c.b16 %v706, %v705
    %v786 = vpack.c.b16 %v708, %v707
    %v787 = vpack.c.b16 %v710, %v709
    %v788 = vpack.c.b16 %v712, %v711
    %v789 = vpack.c.b16 %v714, %v713
    %v790 = vpack.c.b16 %v716, %v715
    %v791 = vpack.c.b16 %v718, %v717
    %v792 = vpack.c.b16 %v720, %v719
    %v793 = vpack.c.b16 %v722, %v721
    %v794 = vpack.c.b16 %v724, %v723
    %v795 = vpack.c.b16 %v726, %v725
    %v796 = vpack.c.b16 %v728, %v727
    %v797 = vpack.c.b16 %v730, %v729
    %v798 = vpack.c.b16 %v732, %v731
    %v799 = vpack.c.b16 %v734, %v733
    %v800 = vpack.c.b16 %v736, %v735
    %865 = vmatprep.subr.bf16.mxu0 0
    %866 = vmatpush1.bf16.msra.mxu0 %v744
    %867 = vmatprep.subr.bf16.mxu0 0
    %868 = vmatpush1.bf16.msra.mxu0 %v743
    %869 = vmatprep.subr.bf16.mxu0 0
    %870 = vmatpush1.bf16.msra.mxu0 %v742
    %871 = vmatprep.subr.bf16.mxu0 0
    %872 = vmatpush1.bf16.msra.mxu0 %v741
    %873 = vmatprep.subr.bf16.mxu0 0
    %874 = vmatpush1.bf16.msra.mxu0 %v740
    %875 = vmatprep.subr.bf16.mxu0 0
    %876 = vmatpush1.bf16.msra.mxu0 %v739
    %877 = vmatprep.subr.bf16.mxu0 0
    %878 = vmatpush1.bf16.msra.mxu0 %v738
    %879 = vmatprep.subr.bf16.mxu0 0
    %880 = vmatpush1.bf16.msra.mxu0 %v737
    %881 = vmatprep.subr.bf16.mxu0 0
    %882 = vmatpush2.bf16.msra.mxu0 %v752
    %883 = vmatprep.subr.bf16.mxu0 0
    %884 = vmatpush2.bf16.msra.mxu0 %v751
    %885 = vmatprep.subr.bf16.mxu0 0
    %886 = vmatpush2.bf16.msra.mxu0 %v750
    %887 = vmatprep.subr.bf16.mxu0 0
    %888 = vmatpush2.bf16.msra.mxu0 %v749
    %889 = vmatprep.subr.bf16.mxu0 0
    %890 = vmatpush2.bf16.msra.mxu0 %v748
    %891 = vmatprep.subr.bf16.mxu0 0
    %892 = vmatpush2.bf16.msra.mxu0 %v747
    %893 = vmatprep.subr.bf16.mxu0 0
    %894 = vmatpush2.bf16.msra.mxu0 %v746
    %895 = vmatprep.subr.bf16.mxu0 0
    %896 = vmatpush2.bf16.msra.mxu0 %v745
    %897 = vmatprep.mubr.bf16.mxu0 %v339
    %898 = vmatmul.mubr.bf16.gmra.mxu0 %v338
    %v899 = vpop.f32.mrf.mxu0
    %v900 = vadd.f32 %v479, %v899
    %v901 = vpop.f32.mrf.mxu0
    %v902 = vpop.f32.mrf.mxu0
    %v903 = vpop.f32.mrf.mxu0
    %904 = vdwg.mxu0
    %905 = vmatprep.subr.bf16.mxu0 0
    %906 = vmatpush1.bf16.msra.mxu0 %v760
    %907 = vmatprep.subr.bf16.mxu0 0
    %908 = vmatpush1.bf16.msra.mxu0 %v759
    %909 = vmatprep.subr.bf16.mxu0 0
    %910 = vmatpush1.bf16.msra.mxu0 %v758
    %911 = vmatprep.subr.bf16.mxu0 0
    %912 = vmatpush1.bf16.msra.mxu0 %v757
    %913 = vmatprep.subr.bf16.mxu0 0
    %914 = vmatpush1.bf16.msra.mxu0 %v756
    %915 = vmatprep.subr.bf16.mxu0 0
    %916 = vmatpush1.bf16.msra.mxu0 %v755
    %917 = vmatprep.subr.bf16.mxu0 0
    %918 = vmatpush1.bf16.msra.mxu0 %v754
    %919 = vmatprep.subr.bf16.mxu0 0
    %920 = vmatpush1.bf16.msra.mxu0 %v753
    %921 = vmatprep.subr.bf16.mxu0 0
    %922 = vmatpush2.bf16.msra.mxu0 %v768
    %923 = vmatprep.subr.bf16.mxu0 0
    %924 = vmatpush2.bf16.msra.mxu0 %v767
    %925 = vmatprep.subr.bf16.mxu0 0
    %926 = vmatpush2.bf16.msra.mxu0 %v766
    %927 = vmatprep.subr.bf16.mxu0 0
    %928 = vmatpush2.bf16.msra.mxu0 %v765
    %929 = vmatprep.subr.bf16.mxu0 0
    %930 = vmatpush2.bf16.msra.mxu0 %v764
    %931 = vmatprep.subr.bf16.mxu0 0
    %932 = vmatpush2.bf16.msra.mxu0 %v763
    %933 = vmatprep.subr.bf16.mxu0 0
    %934 = vmatpush2.bf16.msra.mxu0 %v762
    %935 = vmatprep.subr.bf16.mxu0 0
    %936 = vmatpush2.bf16.msra.mxu0 %v761
    %937 = vmatprep.mubr.bf16.mxu0 %v341
    %938 = vmatmul.mubr.bf16.gmra.mxu0 %v340
    %v939 = vpop.f32.mrf.mxu0
    %v940 = vadd.f32 %v900, %v939
    %v941 = vpop.f32.mrf.mxu0
    %v942 = vpop.f32.mrf.mxu0
    %v943 = vpop.f32.mrf.mxu0
    %944 = vdwg.mxu0
    %945 = vmatprep.subr.bf16.mxu0 0
    %946 = vmatpush1.bf16.msra.mxu0 %v776
    %947 = vmatprep.subr.bf16.mxu0 0
    %948 = vmatpush1.bf16.msra.mxu0 %v775
    %949 = vmatprep.subr.bf16.mxu0 0
    %950 = vmatpush1.bf16.msra.mxu0 %v774
    %951 = vmatprep.subr.bf16.mxu0 0
    %952 = vmatpush1.bf16.msra.mxu0 %v773
    %953 = vmatprep.subr.bf16.mxu0 0
    %954 = vmatpush1.bf16.msra.mxu0 %v772
    %955 = vmatprep.subr.bf16.mxu0 0
    %956 = vmatpush1.bf16.msra.mxu0 %v771
    %957 = vmatprep.subr.bf16.mxu0 0
    %958 = vmatpush1.bf16.msra.mxu0 %v770
    %959 = vmatprep.subr.bf16.mxu0 0
    %960 = vmatpush1.bf16.msra.mxu0 %v769
    %961 = vmatprep.subr.bf16.mxu0 0
    %962 = vmatpush2.bf16.msra.mxu0 %v784
    %963 = vmatprep.subr.bf16.mxu0 0
    %964 = vmatpush2.bf16.msra.mxu0 %v783
    %965 = vmatprep.subr.bf16.mxu0 0
    %966 = vmatpush2.bf16.msra.mxu0 %v782
    %967 = vmatprep.subr.bf16.mxu0 0
    %968 = vmatpush2.bf16.msra.mxu0 %v781
    %969 = vmatprep.subr.bf16.mxu0 0
    %970 = vmatpush2.bf16.msra.mxu0 %v780
    %971 = vmatprep.subr.bf16.mxu0 0
    %972 = vmatpush2.bf16.msra.mxu0 %v779
    %973 = vmatprep.subr.bf16.mxu0 0
    %974 = vmatpush2.bf16.msra.mxu0 %v778
    %975 = vmatprep.subr.bf16.mxu0 0
    %976 = vmatpush2.bf16.msra.mxu0 %v777
    %977 = vmatprep.mubr.bf16.mxu0 %v343
    %978 = vmatmul.mubr.bf16.gmra.mxu0 %v342
    %v979 = vpop.f32.mrf.mxu0
    %v980 = vadd.f32 %v940, %v979
    %v981 = vpop.f32.mrf.mxu0
    %v982 = vpop.f32.mrf.mxu0
    %v983 = vpop.f32.mrf.mxu0
    %984 = vdwg.mxu0
    %985 = vmatprep.subr.bf16.mxu0 0
    %986 = vmatpush1.bf16.msra.mxu0 %v792
    %987 = vmatprep.subr.bf16.mxu0 0
    %988 = vmatpush1.bf16.msra.mxu0 %v791
    %989 = vmatprep.subr.bf16.mxu0 0
    %990 = vmatpush1.bf16.msra.mxu0 %v790
    %991 = vmatprep.subr.bf16.mxu0 0
    %992 = vmatpush1.bf16.msra.mxu0 %v789
    %993 = vmatprep.subr.bf16.mxu0 0
    %994 = vmatpush1.bf16.msra.mxu0 %v788
    %995 = vmatprep.subr.bf16.mxu0 0
    %996 = vmatpush1.bf16.msra.mxu0 %v787
    %997 = vmatprep.subr.bf16.mxu0 0
    %998 = vmatpush1.bf16.msra.mxu0 %v786
    %999 = vmatprep.subr.bf16.mxu0 0
    %1000 = vmatpush1.bf16.msra.mxu0 %v785
    %1001 = vmatprep.subr.bf16.mxu0 0
    %1002 = vmatpush2.bf16.msra.mxu0 %v800
    %1003 = vmatprep.subr.bf16.mxu0 0
    %1004 = vmatpush2.bf16.msra.mxu0 %v799
    %1005 = vmatprep.subr.bf16.mxu0 0
    %1006 = vmatpush2.bf16.msra.mxu0 %v798
    %1007 = vmatprep.subr.bf16.mxu0 0
    %1008 = vmatpush2.bf16.msra.mxu0 %v797
    %1009 = vmatprep.subr.bf16.mxu0 0
    %1010 = vmatpush2.bf16.msra.mxu0 %v796
    %1011 = vmatprep.subr.bf16.mxu0 0
    %1012 = vmatpush2.bf16.msra.mxu0 %v795
    %1013 = vmatprep.subr.bf16.mxu0 0
    %1014 = vmatpush2.bf16.msra.mxu0 %v794
    %1015 = vmatprep.subr.bf16.mxu0 0
    %1016 = vmatpush2.bf16.msra.mxu0 %v793
    %1017 = vmatprep.mubr.bf16.mxu0 %v345
    %1018 = vmatmul.mubr.bf16.gmra.mxu0 %v344
    %v1019 = vpop.f32.mrf.mxu0
    %v1020 = vadd.f32 %v980, %v1019
    %v1021 = vpop.f32.mrf.mxu0
    %v1022 = vpop.f32.mrf.mxu0
    %v1023 = vpop.f32.mrf.mxu0
    %1024 = vdwg.mxu0
    %vm1025 = vcmask 130048
    %1026 = vst.msk [vmem:[#allocation2] sm:$0xff] %vm1025, %v1020
    // Predicated region
    $region22: #{ctrnet_forward.3} parent=1 // pred_check
      _
    $region23: #{ctrnet_forward.3} parent=1 // pred_check_branch
      %1028 = sbr.rel (0) target = $region25
    $region24: #{ctrnet_forward.3} parent=1 // pred_region
      %s1030 = ssub.s32 128, 128
      %1031 = vsyncadd [#allocation3], %s1030
      %s1033 = sshll.u32 [#allocation2], 4
      %s1034 = int_to_ptr.vmem [resolvable:$true] %s1033
      %1036 = dma.vmem_to_hbm [thread:$0]  %s1034, 128, %s5, [#allocation3]
    $region25: #{ctrnet_forward.3} parent=1 // pred_fallthru
      _
    // Predicated region
    $region26: #{ctrnet_forward.3} parent=1 // pred_check
      _
    $region27: #{ctrnet_forward.3} parent=1 // pred_check_branch
      %1038 = sbr.rel (0) target = $region29
    $region28: #{ctrnet_forward.3} parent=1 // pred_region
      %1039 = dma.done [#allocation3], 128
    $region29: #{ctrnet_forward.3} parent=1 // pred_fallthru
      _
    %1040 = vsyncpa [#allocation3], 1

</llo_original>
